<compile_context>
chip_gen: v7x
topology: tpu7x:2x2x1
jax: 0.10.0
libtpu: 0.0.40
codegen_flags: <defaults>
</compile_context>

<pallas_src>
import functools

import jax
import jax.numpy as jnp
from jax.experimental import pallas as pl
from jax.experimental.pallas import tpu as pltpu


def _round_up(x: int, m: int) -> int:
    return (x + m - 1) // m * m


def unit_kernel(x_ref, w_ref, b_ref, o_ref, acc_ref):
    """One (tm, tn) output tile, accumulated over the K grid axis."""
    k = pl.program_id(2)

    # Initialize the accumulator with the (broadcast) bias at the first K step:
    # bias is applied exactly once per output tile, not once per K iteration.
    @pl.when(k == 0)
    def _():
        acc_ref[...] = jnp.broadcast_to(
            b_ref[...].astype(jnp.float32), acc_ref.shape
        )

    # MXU matmul with f32 accumulation.
    acc_ref[...] += jnp.dot(
        x_ref[...], w_ref[...], preferred_element_type=jnp.float32
    )

    # Finalize: fused tanh (EUP) + lane-dense store.
    @pl.when(k == pl.num_programs(2) - 1)
    def _():
        o_ref[...] = jnp.tanh(acc_ref[...]).astype(o_ref.dtype)


@functools.partial(jax.jit, static_argnames=("tm", "tn", "tk"))
def unit_forward(x, w_t, bias, *, tm=128, tn=128, tk=256):
    """Unit.forward: tanh(x @ W^T + b).

    Args:
      x:    (B, in_N)
      w_t:  (in_N, out_N)  -- weight already stored transposed (done once at init)
      bias: (out_N,)
    Returns:
      (B, out_N) activations.
    """
    M, K = x.shape
    K2, N = w_t.shape
    assert K == K2, (K, K2)
    assert bias.shape == (N,)

    # Adapt tile sizes to (possibly small) problem sizes, keeping (8, 128)
    # layout alignment so stores stay unmasked / lane-dense.
    tm = min(tm, _round_up(M, 8))
    tn = min(tn, _round_up(N, 128))
    tk = min(tk, _round_up(K, 128))

    Mp, Kp, Np = _round_up(M, tm), _round_up(K, tk), _round_up(N, tn)

    # Zero-pad to tile multiples (zeros along K don't change the matmul;
    # padded M rows / N cols are sliced off below).
    if (Mp, Kp) != (M, K):
        x = jnp.pad(x, ((0, Mp - M), (0, Kp - K)))
    if (Kp, Np) != (K, N):
        w_t = jnp.pad(w_t, ((0, Kp - K), (0, Np - N)))
    b2d = bias.reshape(1, N)
    if Np != N:
        b2d = jnp.pad(b2d, ((0, 0), (0, Np - N)))

    grid = (Mp // tm, Np // tn, Kp // tk)  # reduction (K) axis last

    out = pl.pallas_call(
        unit_kernel,
        out_shape=jax.ShapeDtypeStruct((Mp, Np), x.dtype),
        grid=grid,
        in_specs=[
            pl.BlockSpec((tm, tk), lambda i, j, k: (i, k)),   # x tile
            pl.BlockSpec((tk, tn), lambda i, j, k: (k, j)),   # W^T tile
            pl.BlockSpec((1, tn), lambda i, j, k: (0, j)),    # bias tile
        ],
        out_specs=pl.BlockSpec((tm, tn), lambda i, j, k: (i, j)),
        scratch_shapes=[pltpu.VMEM((tm, tn), jnp.float32)],
        compiler_params=pltpu.CompilerParams(
            dimension_semantics=("parallel", "parallel", "arbitrary"),
        ),
    )(x, w_t, b2d)

    if (Mp, Np) != (M, N):
        out = out[:M, :N]
    return out


def init_unit_params(key, in_N, out_N, dtype=jnp.float32):
    """Mimic nn.Linear init; store the weight pre-transposed as (in_N, out_N)."""
    kw, kb = jax.random.split(key)
    bound = 1.0 / (in_N ** 0.5)
    # PyTorch-layout weight (out_N, in_N), transposed ONCE here at init time.
    weight = jax.random.uniform(kw, (out_N, in_N), dtype=dtype,
                                minval=-bound, maxval=bound)
    bias = jax.random.uniform(kb, (out_N,), dtype=dtype,
                              minval=-bound, maxval=bound)
    return jnp.asarray(weight.T), bias, weight  # (w_t, bias, torch-layout ref)


if __name__ == "__main__":
    key = jax.random.PRNGKey(0)
    kx, kp, kx2, kp2 = jax.random.split(key, 4)

    # Primary test: small but lane-dense / MXU-aligned shapes
    # (128-lane-aligned output -> unmasked stores, full-width MXU tiles).
    B, in_N, out_N = 128, 128, 256
    x = jax.random.normal(kx, (B, in_N), dtype=jnp.float32)
    w_t, bias, weight = init_unit_params(kp, in_N, out_N)

    out = unit_forward(x, w_t, bias)
    jax.block_until_ready(out)

    ref = jnp.tanh(x @ weight.T + bias)
    assert out.shape == (B, out_N)
    assert jnp.allclose(out, ref, atol=1e-5, rtol=1e-5)

    # Secondary test: the original tiny, unaligned Unit shapes -> exercises
    # the padding path (out_N=32 padded to a 128-lane tile, sliced back).
    B2, in2, out2 = 8, 32, 32
    x2 = jax.random.normal(kx2, (B2, in2), dtype=jnp.float32)
    w_t2, bias2, weight2 = init_unit_params(kp2, in2, out2)

    out2_v = unit_forward(x2, w_t2, bias2)
    jax.block_until_ready(out2_v)

    ref2 = jnp.tanh(x2 @ weight2.T + bias2)
    assert out2_v.shape == (B2, out2)
    assert jnp.allclose(out2_v, ref2, atol=1e-5, rtol=1e-5)

    print("KERNEL_OK")
</pallas_src>

<mosaic_0001>
module attributes {stable_mosaic.version = 11 : i64} {
  func.func @unit_kernel(%arg0: i32, %arg1: i32, %arg2: i32, %arg3: memref<128x128xf32, #tpu.memory_space<vmem>>, %arg4: memref<128x128xf32, #tpu.memory_space<vmem>>, %arg5: memref<1x128xf32, #tpu.memory_space<vmem>>, %arg6: memref<128x128xf32, #tpu.memory_space<vmem>>, %arg7: memref<128x128xf32, #tpu.memory_space<vmem>>) attributes {dimension_semantics = [#tpu.dimension_semantics<parallel>, #tpu.dimension_semantics<parallel>, #tpu.dimension_semantics<arbitrary>], iteration_bounds = array<i64: 1, 2, 1>, scalar_prefetch = 0 : i64, scratch_operands = 1 : i64, tpu.core_type = #tpu.core_type<tc>, window_params = [{transform_indices = @transform_0, window_bounds = array<i64: 128, 128>}, {transform_indices = @transform_1, window_bounds = array<i64: 128, 128>}, {transform_indices = @transform_2, window_bounds = array<i64: 1, 128>}, {transform_indices = @transform_3, window_bounds = array<i64: 128, 128>}]} {
    %c0_i32 = arith.constant 0 : i32
    %0 = arith.cmpi eq, %arg2, %c0_i32 : i32
    %1 = arith.extui %0 : i1 to i32
    %c0_i32_0 = arith.constant 0 : i32
    %2 = arith.cmpi ne, %1, %c0_i32_0 : i32
    scf.if %2 {
      %c0_10 = arith.constant 0 : index
      %c0_11 = arith.constant 0 : index
      %12 = vector.load %arg5[%c0_10, %c0_11] : memref<1x128xf32, #tpu.memory_space<vmem>>, vector<1x128xf32>
      %13 = vector.shape_cast %12 : vector<1x128xf32> to vector<1x128xf32>
      %14 = vector.broadcast %13 : vector<1x128xf32> to vector<128x128xf32>
      %c0_12 = arith.constant 0 : index
      %c0_13 = arith.constant 0 : index
      %15 = vector.load %arg7[%c0_12, %c0_13] : memref<128x128xf32, #tpu.memory_space<vmem>>, vector<128x128xf32>
      tpu.vector_store %arg7[%c0_12, %c0_13], %14 {strides = array<i32>} : memref<128x128xf32, #tpu.memory_space<vmem>>, vector<128x128xf32>,
    } else {
    }
    %c0 = arith.constant 0 : index
    %c0_1 = arith.constant 0 : index
    %3 = vector.load %arg7[%c0, %c0_1] : memref<128x128xf32, #tpu.memory_space<vmem>>, vector<128x128xf32>
    %c0_2 = arith.constant 0 : index
    %c0_3 = arith.constant 0 : index
    %4 = vector.load %arg3[%c0_2, %c0_3] : memref<128x128xf32, #tpu.memory_space<vmem>>, vector<128x128xf32>
    %c0_4 = arith.constant 0 : index
    %c0_5 = arith.constant 0 : index
    %5 = vector.load %arg4[%c0_4, %c0_5] : memref<128x128xf32, #tpu.memory_space<vmem>>, vector<128x128xf32>
    %cst = arith.constant dense<0.000000e+00> : vector<128x128xf32>
    %6 = tpu.matmul %4, %5, %cst {dimension_numbers = #tpu.dot_dimension_numbers<[1], [0], [0], [1], [0, 0, 1, 1], [], []>} : vector<128x128xf32>, vector<128x128xf32>, vector<128x128xf32> -> vector<128x128xf32>
    %7 = arith.addf %3, %6 : vector<128x128xf32>
    %c0_6 = arith.constant 0 : index
    %c0_7 = arith.constant 0 : index
    %8 = vector.load %arg7[%c0_6, %c0_7] : memref<128x128xf32, #tpu.memory_space<vmem>>, vector<128x128xf32>
    tpu.vector_store %arg7[%c0_6, %c0_7], %7 {strides = array<i32>} : memref<128x128xf32, #tpu.memory_space<vmem>>, vector<128x128xf32>,
    %c0_i32_8 = arith.constant 0 : i32
    %9 = arith.cmpi eq, %arg2, %c0_i32_8 : i32
    %10 = arith.extui %9 : i1 to i32
    %c0_i32_9 = arith.constant 0 : i32
    %11 = arith.cmpi ne, %10, %c0_i32_9 : i32
    scf.if %11 {
      %c0_10 = arith.constant 0 : index
      %c0_11 = arith.constant 0 : index
      %12 = vector.load %arg7[%c0_10, %c0_11] : memref<128x128xf32, #tpu.memory_space<vmem>>, vector<128x128xf32>
      %13 = math.tanh %12 : vector<128x128xf32>
      %c0_12 = arith.constant 0 : index
      %c0_13 = arith.constant 0 : index
      %14 = vector.load %arg6[%c0_12, %c0_13] : memref<128x128xf32, #tpu.memory_space<vmem>>, vector<128x128xf32>
      tpu.vector_store %arg6[%c0_12, %c0_13], %13 {strides = array<i32>} : memref<128x128xf32, #tpu.memory_space<vmem>>, vector<128x128xf32>,
    } else {
    }
    return
  }
  func.func @transform_0(%arg0: i32, %arg1: i32, %arg2: i32) -> (i32, i32) {
    %c0_i32 = arith.constant 0 : i32
    return %arg0, %arg2 : i32, i32
  }
  func.func @transform_1(%arg0: i32, %arg1: i32, %arg2: i32) -> (i32, i32) {
    %c0_i32 = arith.constant 0 : i32
    return %arg2, %arg1 : i32, i32
  }
  func.func @transform_2(%arg0: i32, %arg1: i32, %arg2: i32) -> (i32, i32) {
    %c0_i32 = arith.constant 0 : i32
    %c0_i32_0 = arith.constant 0 : i32
    return %c0_i32, %arg1 : i32, i32
  }
  func.func @transform_3(%arg0: i32, %arg1: i32, %arg2: i32) -> (i32, i32) {
    %c0_i32 = arith.constant 0 : i32
    return %arg0, %arg1 : i32, i32
  }
}

</mosaic_0001>

<llo_original>
// kernel: unit_forward.1
$region0: #{unit_forward.1}
  #allocation0 [shape = 'u32[]', space=smem, size = 0x4, offset = 0x4, fixed_abs, tag = 'smem constant byte address 0x4 - core index']
  #allocation1 [shape = 'u32[144,128]{1,0:T(1,128)}', space=vmem, size = 0x12000, scoped, tag = 'internal scratch']
  #allocation2 [shape = 'f32[128,128]{1,0:T(8,128)}', space=vmem, size = 0x10000, scoped, tag = 'scratch operand']
  %s0 = inlined_call_operand.hbm [shape: f32[128,128], index: 0, kind: input, shape index: {}]
  %s1 = inlined_call_operand.hbm [shape: f32[128,256], index: 1, kind: input, shape index: {}]
  %s2 = inlined_call_operand.vmem [shape: f32[1,256], index: 2, kind: input, shape index: {}]
  %s3 = inlined_call_operand.hbm [shape: f32[128,256], index: 3, kind: output, shape index: {}]
  %s4 = sld [smem:[#allocation0]]
  $region61: #{unit_forward.1} parent=0
    _
  %s6 = ssub.s32 1, %s4
  %s7 = scalar_select 0, %s6, %s4
  $region1: #{unit_forward.1} parent=0
    #allocation3 [shape = 'u8[65536]{0}', space=vmem, size = 0x10000, scoped, tag = 'input window, operand 0, single buffered']
    #allocation4 [shape = 's32[2]{0}', space=sflag, size = 0x8, scoped, tag = 'scoped memory for unit_forward.1']
    #allocation5 [shape = 's32[2]{0}', space=sflag, size = 0x8, scoped, tag = 'scoped memory for unit_forward.1']
    #allocation6 [shape = 'u8[131072]{0}', space=vmem, size = 0x20000, scoped, tag = 'input window, operand 1']
    #allocation7 [shape = 's32[2]{0}', space=sflag, size = 0x8, scoped, tag = 'scoped memory for unit_forward.1']
    #allocation8 [shape = 'u8[131072]{0}', space=vmem, size = 0x20000, scoped, tag = 'output window, operand 0']
    %8 = vsyncpa [#allocation4], 0
    %9 = vsyncpa [#allocation7], 0
    %s10 = scalar_lea.sflag [#allocation7], 1
    %11 = vsyncpa %s10, 0
    %12 = vsyncpa [#allocation5], 0
    %s13 = scalar_lea.sflag [#allocation5], 1
    %14 = vsyncpa %s13, 0
    loop: start=0, step=1, limit=4
    $region2: #{unit_forward.1} parent=1 // loop_pre_header
      _
    $region3: #{unit_forward.1} parent=1 // loop_header
      %s16 = sphi 0, %s20
      %p17 = scmp.ge.s32.totalorder %s16, 4
      %s23 = sphi 0, %s42
      %s24 = sphi 0, %s38
      %s25 = sphi 0, %s34
      %s26 = sphi 0, %s23
      %s27 = sphi 0, %s24
      %s28 = sphi 0, %s25
      %s29 = sphi 0, %s26
      %s30 = sphi 0, %s27
      %s31 = sphi 0, %s28
      %s47 = sphi 0, %s49
      %s50 = sphi 0, %s47
      %s51 = sphi 0, %s50
      %s67 = sphi 0, %s51
      %s75 = sphi 0, %s77
      %s78 = sphi 0, %s75
      %s79 = sphi 0, %s78
      %s95 = sphi 0, %s79
      %s101 = sphi 0, %s103
      %s104 = sphi 0, %s101
      %s105 = sphi 0, %s104
      %s121 = sphi 0, %s105
      %s129 = sphi 0, %s131
      %s132 = sphi 0, %s129
      %s133 = sphi 0, %s132
      %s149 = sphi 0, %s133
    $region4: #{unit_forward.1} parent=1 // loop_header_branch
      %19 = sbr.rel (%p17) target = $region8
    $region5: #{unit_forward.1} parent=1 // loop_body
      %s21 = ssub.s32 %s16, 1
      %s22 = ssub.s32 %s16, 2
      %s32 = sadd.s32 1, %s25
      %p33 = scmp.ge.s32.totalorder %s32, 1
      %s34 = scalar_select %p33, 0, %s32
      %s35 = sadd.s32 1, %s24
      %s36 = scalar_select %p33, %s35, %s24
      %p37 = scmp.ge.s32.totalorder %s36, 2
      %s38 = scalar_select %p37, 0, %s36
      %s39 = sadd.s32 1, %s23
      %s40 = scalar_select %p37, %s39, %s23
      %p41 = scmp.ge.s32.totalorder %s40, 1
      %s42 = scalar_select %p41, 0, %s40
      %s43 = ssub.s32 %s23, %s42
      %s44 = ssub.s32 %s25, %s34
      %s45 = sor.u32 %s43, %s44
      %p46 = scmp.eq.s32.totalorder %s45, 0
      %s48 = sadd.s32 %s47, 1
      %s49 = scalar_select %p46, %s47, %s48
      %p52 = pneg %p46
      %p53 = scmp.eq.s32.totalorder %s16, 1
      %p54 = por %p52, %p53
      %p55 = scmp.ne.s32.totalorder %s47, %s50
      %p56 = scmp.eq.s32.totalorder %s16, 0
      %p57 = por %p55, %p56
      %p58 = scmp.ne.s32.totalorder %s47, %s50
      %p59 = scmp.eq.s32.totalorder %s21, 1
      %p60 = por %p58, %p59
      %p61 = scmp.ne.s32.totalorder %s50, %s51
      %p62 = scmp.eq.s32.totalorder %s21, 0
      %p63 = por %p61, %p62
      %p64 = scmp.ne.s32.totalorder %s50, %s51
      %p65 = scmp.eq.s32.totalorder %s22, 1
      %p66 = por %p64, %p65
      %p68 = scmp.ne.s32.totalorder %s51, %s67
      %p69 = scmp.eq.s32.totalorder %s22, 0
      %p70 = por %p68, %p69
      %s71 = ssub.s32 %s25, %s34
      %s72 = ssub.s32 %s24, %s38
      %s73 = sor.u32 %s71, %s72
      %p74 = scmp.eq.s32.totalorder %s73, 0
      %s76 = sadd.s32 %s75, 1
      %s77 = scalar_select %p74, %s75, %s76
      %p80 = pneg %p74
      %p81 = scmp.eq.s32.totalorder %s16, 1
      %p82 = por %p80, %p81
      %p83 = scmp.ne.s32.totalorder %s75, %s78
      %p84 = scmp.eq.s32.totalorder %s16, 0
      %p85 = por %p83, %p84
      %p86 = scmp.ne.s32.totalorder %s75, %s78
      %p87 = scmp.eq.s32.totalorder %s21, 1
      %p88 = por %p86, %p87
      %p89 = scmp.ne.s32.totalorder %s78, %s79
      %p90 = scmp.eq.s32.totalorder %s21, 0
      %p91 = por %p89, %p90
      %p92 = scmp.ne.s32.totalorder %s78, %s79
      %p93 = scmp.eq.s32.totalorder %s22, 1
      %p94 = por %p92, %p93
      %p96 = scmp.ne.s32.totalorder %s79, %s95
      %p97 = scmp.eq.s32.totalorder %s22, 0
      %p98 = por %p96, %p97
      %s99 = ssub.s32 %s24, %s38
      %p100 = scmp.eq.s32.totalorder %s99, 0
      %s102 = sadd.s32 %s101, 1
      %s103 = scalar_select %p100, %s101, %s102
      %p106 = pneg %p100
      %p107 = scmp.eq.s32.totalorder %s16, 1
      %p108 = por %p106, %p107
      %p109 = scmp.ne.s32.totalorder %s101, %s104
      %p110 = scmp.eq.s32.totalorder %s16, 0
      %p111 = por %p109, %p110
      %p112 = scmp.ne.s32.totalorder %s101, %s104
      %p113 = scmp.eq.s32.totalorder %s21, 1
      %p114 = por %p112, %p113
      %p115 = scmp.ne.s32.totalorder %s104, %s105
      %p116 = scmp.eq.s32.totalorder %s21, 0
      %p117 = por %p115, %p116
      %p118 = scmp.ne.s32.totalorder %s104, %s105
      %p119 = scmp.eq.s32.totalorder %s22, 1
      %p120 = por %p118, %p119
      %p122 = scmp.ne.s32.totalorder %s105, %s121
      %p123 = scmp.eq.s32.totalorder %s22, 0
      %p124 = por %p122, %p123
      %s125 = ssub.s32 %s23, %s42
      %s126 = ssub.s32 %s24, %s38
      %s127 = sor.u32 %s125, %s126
      %p128 = scmp.eq.s32.totalorder %s127, 0
      %s130 = sadd.s32 %s129, 1
      %s131 = scalar_select %p128, %s129, %s130
      %p134 = pneg %p128
      %p135 = scmp.eq.s32.totalorder %s16, 1
      %p136 = por %p134, %p135
      %p137 = scmp.ne.s32.totalorder %s129, %s132
      %p138 = scmp.eq.s32.totalorder %s16, 0
      %p139 = por %p137, %p138
      %p140 = scmp.ne.s32.totalorder %s129, %s132
      %p141 = scmp.eq.s32.totalorder %s21, 1
      %p142 = por %p140, %p141
      %p143 = scmp.ne.s32.totalorder %s132, %s133
      %p144 = scmp.eq.s32.totalorder %s21, 0
      %p145 = por %p143, %p144
      %p146 = scmp.ne.s32.totalorder %s132, %s133
      %p147 = scmp.eq.s32.totalorder %s22, 1
      %p148 = por %p146, %p147
      %p150 = scmp.ne.s32.totalorder %s133, %s149
      %p151 = scmp.eq.s32.totalorder %s22, 0
      %p152 = por %p150, %p151
      %p153 = scmp.le.s32.totalorder 1, %s16
      %p154 = scmp.lt.s32.totalorder %s16, 3
      %p155 = pnand %p153, %p154
      %p156 = pneg %p155
      // Predicated region
      $region9: #{unit_forward.1} parent=5 // pred_check
        _
      $region10: #{unit_forward.1} parent=5 // pred_check_branch
        %158 = sbr.rel (%p155) target = $region12
      $region11: #{unit_forward.1} parent=5 // pred_region
        %s159 = ssub.s32 %s16, 1
        // Predicated region
        $region13: #{unit_forward.1} parent=11 // pred_check
          %p160 = pneg %p63
        $region14: #{unit_forward.1} parent=11 // pred_check_branch
          %162 = sbr.rel (%p160) target = $region16
        $region15: #{unit_forward.1} parent=11 // pred_region
          %s163 = smul.u32 16, %s26
          %s165 = ssub.s32 2048, 2048
          %166 = vsyncadd [#allocation4], %s165
          %s167 = sadd.s32 %s28, %s163
          %s168 = smul.addr %s167, 128
          %s169 = scalar_lea.hbm %s0, %s168
          %s170 = sshll.u32 [#allocation3], 4
          %s171 = int_to_ptr.vmem [resolvable:$true] %s170
          %176 = dma.hbm_to_vmem [thread:$0]  %s169, 2048, %s171, [#allocation4], 128, 128, 8
        $region16: #{unit_forward.1} parent=11 // pred_fallthru
          _
      $region12: #{unit_forward.1} parent=5 // pred_fallthru
        _
      %p177 = scmp.lt.s32.totalorder %s16, 2
      // Predicated region
      $region17: #{unit_forward.1} parent=5 // pred_check
        %p178 = pneg %p177
      $region18: #{unit_forward.1} parent=5 // pred_check_branch
        %180 = sbr.rel (%p178) target = $region20
      $region19: #{unit_forward.1} parent=5 // pred_region
        // Predicated region
        $region21: #{unit_forward.1} parent=19 // pred_check
          %p181 = pneg %p85
        $region22: #{unit_forward.1} parent=19 // pred_check_branch
          %183 = sbr.rel (%p181) target = $region24
        $region23: #{unit_forward.1} parent=19 // pred_region
          %s184 = sand.u32 %s75, 1
          %s185 = scalar_lea.sflag [#allocation7], %s184
          %s186 = sand.u32 %s75, 1
          %s187 = smul.addr %s186, 128
          %s188 = scalar_lea.vmem [#allocation6], %s187
          %s189 = smul.u32 16, %s25
          %s191 = ssub.s32 2048, 2048
          %192 = vsyncadd %s185, %s191
          %s193 = smul.addr %s189, 2
          %s194 = sadd.s32 %s24, %s193
          %s195 = smul.addr %s194, 128
          %s196 = scalar_lea.hbm %s1, %s195
          %s197 = sshll.u32 %s188, 4
          %s198 = int_to_ptr.vmem [resolvable:$true] %s197
          %203 = dma.hbm_to_vmem [thread:$0]  %s196, 2048, %s198, %s185, 256, 128, 8
        $region24: #{unit_forward.1} parent=19 // pred_fallthru
          _
        // Predicated region
        $region25: #{unit_forward.1} parent=19 // pred_check
          %p204 = pneg %p111
        $region26: #{unit_forward.1} parent=19 // pred_check_branch
          %206 = sbr.rel (%p204) target = $region28
        $region27: #{unit_forward.1} parent=19 // pred_region
          %p207 = scmp.lt.s32.totalorder %s24, 1
          %s208 = scalar_select %p207, %s24, 1
          %s209 = scalar_lea.vmem %s2, %s208
        $region28: #{unit_forward.1} parent=19 // pred_fallthru
          _
      $region20: #{unit_forward.1} parent=5 // pred_fallthru
        _
      %p210 = scmp.le.s32.totalorder 1, %s16
      %p211 = scmp.lt.s32.totalorder %s16, 3
      %p212 = pnand %p210, %p211
      %p213 = pneg %p212
      // Predicated region
      $region29: #{unit_forward.1} parent=5 // pred_check
        _
      $region30: #{unit_forward.1} parent=5 // pred_check_branch
        %215 = sbr.rel (%p212) target = $region32
      $region31: #{unit_forward.1} parent=5 // pred_region
        %s216 = ssub.s32 %s16, 1
        // Predicated region
        $region33: #{unit_forward.1} parent=31 // pred_check
          %p217 = pneg %p63
        $region34: #{unit_forward.1} parent=31 // pred_check_branch
          %219 = sbr.rel (%p217) target = $region36
        $region35: #{unit_forward.1} parent=31 // pred_region
          %220 = dma.done [#allocation4], 2048
        $region36: #{unit_forward.1} parent=31 // pred_fallthru
          _
        %s221 = sand.u32 %s78, 1
        %s222 = scalar_lea.sflag [#allocation7], %s221
        %s223 = sand.u32 %s78, 1
        %s224 = smul.addr %s223, 128
        %s225 = scalar_lea.vmem [#allocation6], %s224
        // Predicated region
        $region37: #{unit_forward.1} parent=31 // pred_check
          %p226 = pneg %p91
        $region38: #{unit_forward.1} parent=31 // pred_check_branch
          %228 = sbr.rel (%p226) target = $region40
        $region39: #{unit_forward.1} parent=31 // pred_region
          %229 = dma.done %s222, 2048
        $region40: #{unit_forward.1} parent=31 // pred_fallthru
          _
        %p230 = pneg %p63
        %p231 = pneg %p60
        %s232 = sand.u32 %s78, 1
        %s233 = scalar_lea.sflag [#allocation7], %s232
        %s234 = sand.u32 %s78, 1
        %s235 = smul.addr %s234, 128
        %s236 = scalar_lea.vmem [#allocation6], %s235
        %p237 = pneg %p91
        %p238 = pneg %p88
        %p239 = scmp.lt.s32.totalorder %s27, 1
        %s240 = scalar_select %p239, %s27, 1
        %s241 = scalar_lea.vmem %s2, %s240
        %p242 = pneg %p117
        %p243 = pneg %p114
        %p244 = pneg %p145
        %p245 = pneg %p142
        %s246 = sand.u32 %s132, 1
        %s247 = scalar_lea.sflag [#allocation5], %s246
        %s248 = sand.u32 %s132, 1
        %s249 = smul.addr %s248, 128
        %s250 = scalar_lea.vmem [#allocation8], %s249
        %s251 = smul.u32 16, %s26
        %s252 = smul.u32 16, %s28
        %p253 = scmp.lt.s32.totalorder %s27, 1
        %s254 = scalar_select %p253, %s27, 1
        %s255 = scalar_lea.vmem %s2, %s254
        %s256 = smul.u32 16, %s26
        %p257 = scmp.eq.s32.totalorder %s28, 0
        // Predicated region
        $region41: #{unit_forward.1} parent=31 // pred_check
          %p258 = pneg %p257
        $region42: #{unit_forward.1} parent=31 // pred_check_branch
          %260 = sbr.rel (%p258) target = $region44
        $region43: #{unit_forward.1} parent=31 // pred_region
          %v261 = vld [vmem:[%s255] sm:$0x1]
          %v263 = vlaneseq
          %v264 = vshrl.u32 %v263, 7
          %v265 = vsub.s32 0, %v264
          %v266 = vrot.slane %v261, %v265
          %268 = vst [vmem:[#allocation2] sm:$0xff] %v266
          %269 = vst [vmem:[#allocation2 + $0x8] sm:$0xff] %v266
          %270 = vst [vmem:[#allocation2 + $0x10] sm:$0xff] %v266
          %271 = vst [vmem:[#allocation2 + $0x18] sm:$0xff] %v266
          %272 = vst [vmem:[#allocation2 + $0x20] sm:$0xff] %v266
          %273 = vst [vmem:[#allocation2 + $0x28] sm:$0xff] %v266
          %274 = vst [vmem:[#allocation2 + $0x30] sm:$0xff] %v266
          %275 = vst [vmem:[#allocation2 + $0x38] sm:$0xff] %v266
          %276 = vst [vmem:[#allocation2 + $0x40] sm:$0xff] %v266
          %277 = vst [vmem:[#allocation2 + $0x48] sm:$0xff] %v266
          %278 = vst [vmem:[#allocation2 + $0x50] sm:$0xff] %v266
          %279 = vst [vmem:[#allocation2 + $0x58] sm:$0xff] %v266
          %280 = vst [vmem:[#allocation2 + $0x60] sm:$0xff] %v266
          %281 = vst [vmem:[#allocation2 + $0x68] sm:$0xff] %v266
          %282 = vst [vmem:[#allocation2 + $0x70] sm:$0xff] %v266
          %283 = vst [vmem:[#allocation2 + $0x78] sm:$0xff] %v266
        $region44: #{unit_forward.1} parent=31 // pred_fallthru
          _
        %v284 = vld [vmem:[#allocation2] sm:$0xff]
        %v285 = vld [vmem:[#allocation2 + $0x8] sm:$0xff]
        %v286 = vld [vmem:[#allocation2 + $0x10] sm:$0xff]
        %v287 = vld [vmem:[#allocation2 + $0x18] sm:$0xff]
        %v288 = vld [vmem:[#allocation2 + $0x20] sm:$0xff]
        %v289 = vld [vmem:[#allocation2 + $0x28] sm:$0xff]
        %v290 = vld [vmem:[#allocation2 + $0x30] sm:$0xff]
        %v291 = vld [vmem:[#allocation2 + $0x38] sm:$0xff]
        %v292 = vld [vmem:[#allocation2 + $0x40] sm:$0xff]
        %v293 = vld [vmem:[#allocation2 + $0x48] sm:$0xff]
        %v294 = vld [vmem:[#allocation2 + $0x50] sm:$0xff]
        %v295 = vld [vmem:[#allocation2 + $0x58] sm:$0xff]
        %v296 = vld [vmem:[#allocation2 + $0x60] sm:$0xff]
        %v297 = vld [vmem:[#allocation2 + $0x68] sm:$0xff]
        %v298 = vld [vmem:[#allocation2 + $0x70] sm:$0xff]
        %v299 = vld [vmem:[#allocation2 + $0x78] sm:$0xff]
        %v300 = vld [vmem:[#allocation3] sm:$0xff]
        %v301 = vld [vmem:[#allocation3 + $0x8] sm:$0xff]
        %v302 = vld [vmem:[#allocation3 + $0x10] sm:$0xff]
        %v303 = vld [vmem:[#allocation3 + $0x18] sm:$0xff]
        %v304 = vld [vmem:[#allocation3 + $0x20] sm:$0xff]
        %v305 = vld [vmem:[#allocation3 + $0x28] sm:$0xff]
        %v306 = vld [vmem:[#allocation3 + $0x30] sm:$0xff]
        %v307 = vld [vmem:[#allocation3 + $0x38] sm:$0xff]
        %v308 = vld [vmem:[#allocation3 + $0x40] sm:$0xff]
        %v309 = vld [vmem:[#allocation3 + $0x48] sm:$0xff]
        %v310 = vld [vmem:[#allocation3 + $0x50] sm:$0xff]
        %v311 = vld [vmem:[#allocation3 + $0x58] sm:$0xff]
        %v312 = vld [vmem:[#allocation3 + $0x60] sm:$0xff]
        %v313 = vld [vmem:[#allocation3 + $0x68] sm:$0xff]
        %v314 = vld [vmem:[#allocation3 + $0x70] sm:$0xff]
        %v315 = vld [vmem:[#allocation3 + $0x78] sm:$0xff]
        %v316 = vld [vmem:[%s225] sm:$0xff]
        %v317 = vld [vmem:[%s225 + $0x8] sm:$0xff]
        %v318 = vld [vmem:[%s225 + $0x10] sm:$0xff]
        %v319 = vld [vmem:[%s225 + $0x18] sm:$0xff]
        %v320 = vld [vmem:[%s225 + $0x20] sm:$0xff]
        %v321 = vld [vmem:[%s225 + $0x28] sm:$0xff]
        %v322 = vld [vmem:[%s225 + $0x30] sm:$0xff]
        %v323 = vld [vmem:[%s225 + $0x38] sm:$0xff]
        %v324 = vld [vmem:[%s225 + $0x40] sm:$0xff]
        %v325 = vld [vmem:[%s225 + $0x48] sm:$0xff]
        %v326 = vld [vmem:[%s225 + $0x50] sm:$0xff]
        %v327 = vld [vmem:[%s225 + $0x58] sm:$0xff]
        %v328 = vld [vmem:[%s225 + $0x60] sm:$0xff]
        %v329 = vld [vmem:[%s225 + $0x68] sm:$0xff]
        %v330 = vld [vmem:[%s225 + $0x70] sm:$0xff]
        %v331 = vld [vmem:[%s225 + $0x78] sm:$0xff]
        %332 = vmatprep.subr.mxu0 0.0
        %333 = vmatpush1.msra.mxu0 %v316
        %334 = vmatprep.subr.mxu0 0.0
        %335 = vmatpush1.msra.mxu0 %v317
        %336 = vmatprep.subr.mxu0 0.0
        %337 = vmatpush1.msra.mxu0 %v318
        %338 = vmatprep.subr.mxu0 0.0
        %339 = vmatpush1.msra.mxu0 %v319
        %340 = vmatprep.subr.mxu0 0.0
        %341 = vmatpush1.msra.mxu0 %v320
        %342 = vmatprep.subr.mxu0 0.0
        %343 = vmatpush1.msra.mxu0 %v321
        %344 = vmatprep.subr.mxu0 0.0
        %345 = vmatpush1.msra.mxu0 %v322
        %346 = vmatprep.subr.mxu0 0.0
        %347 = vmatpush1.msra.mxu0 %v323
        %348 = vmatprep.subr.mxu0 0.0
        %349 = vmatpush1.msra.mxu0 %v324
        %350 = vmatprep.subr.mxu0 0.0
        %351 = vmatpush1.msra.mxu0 %v325
        %352 = vmatprep.subr.mxu0 0.0
        %353 = vmatpush1.msra.mxu0 %v326
        %354 = vmatprep.subr.mxu0 0.0
        %355 = vmatpush1.msra.mxu0 %v327
        %356 = vmatprep.subr.mxu0 0.0
        %357 = vmatpush1.msra.mxu0 %v328
        %358 = vmatprep.subr.mxu0 0.0
        %359 = vmatpush1.msra.mxu0 %v329
        %360 = vmatprep.subr.mxu0 0.0
        %361 = vmatpush1.msra.mxu0 %v330
        %362 = vmatprep.subr.mxu0 0.0
        %363 = vmatpush1.msra.mxu0 %v331
        %364 = vmatprep.subr.mxu0 0.0
        %365 = vmatpush1.msra.mxu0 0.0
        %366 = vmatprep.subr.mxu0 0.0
        %367 = vmatpush1.msra.mxu0 0.0
        %368 = vmatprep.subr.mxu0 0.0
        %369 = vmatpush1.msra.mxu0 0.0
        %370 = vmatprep.subr.mxu0 0.0
        %371 = vmatpush1.msra.mxu0 0.0
        %372 = vmatprep.subr.mxu0 0.0
        %373 = vmatpush1.msra.mxu0 0.0
        %374 = vmatprep.subr.mxu0 0.0
        %375 = vmatpush1.msra.mxu0 0.0
        %376 = vmatprep.subr.mxu0 0.0
        %377 = vmatpush1.msra.mxu0 0.0
        %378 = vmatprep.subr.mxu0 0.0
        %379 = vmatpush1.msra.mxu0 0.0
        %380 = vmatprep.subr.mxu0 0.0
        %381 = vmatpush1.msra.mxu0 0.0
        %382 = vmatprep.subr.mxu0 0.0
        %383 = vmatpush1.msra.mxu0 0.0
        %384 = vmatprep.subr.mxu0 0.0
        %385 = vmatpush1.msra.mxu0 0.0
        %386 = vmatprep.subr.mxu0 0.0
        %387 = vmatpush1.msra.mxu0 0.0
        %388 = vmatprep.subr.mxu0 0.0
        %389 = vmatpush1.msra.mxu0 0.0
        %390 = vmatprep.subr.mxu0 0.0
        %391 = vmatpush1.msra.mxu0 0.0
        %392 = vmatprep.subr.mxu0 0.0
        %393 = vmatpush1.msra.mxu0 0.0
        %394 = vmatprep.subr.mxu0 0.0
        %395 = vmatpush1.msra.mxu0 0.0
        %396 = vmatprep.mubr.f32.mxu0 0.0
        %397 = vmatmul.mubr.f32.gmra.mrb[0].mxu0 %v300
        %v398 = vpop.f32.mrb[0].mxu0
        %v399 = vadd.f32 0.0, %v398
        %v400 = vpop.f32.mrb[0].mxu0
        %401 = vmatprep.mubr.f32.mxu0 0.0
        %402 = vmatmul.mubr.f32.gmra.mrb[0].mxu0 %v301
        %v403 = vpop.f32.mrb[0].mxu0
        %v404 = vadd.f32 0.0, %v403
        %v405 = vpop.f32.mrb[0].mxu0
        %406 = vmatprep.mubr.f32.mxu0 0.0
        %407 = vmatmul.mubr.f32.gmra.mrb[0].mxu0 %v302
        %v408 = vpop.f32.mrb[0].mxu0
        %v409 = vadd.f32 0.0, %v408
        %v410 = vpop.f32.mrb[0].mxu0
        %411 = vmatprep.mubr.f32.mxu0 0.0
        %412 = vmatmul.mubr.f32.gmra.mrb[0].mxu0 %v303
        %v413 = vpop.f32.mrb[0].mxu0
        %v414 = vadd.f32 0.0, %v413
        %v415 = vpop.f32.mrb[0].mxu0
        %416 = vmatprep.mubr.f32.mxu0 0.0
        %417 = vmatmul.mubr.f32.gmra.mrb[0].mxu0 %v304
        %v418 = vpop.f32.mrb[0].mxu0
        %v419 = vadd.f32 0.0, %v418
        %v420 = vpop.f32.mrb[0].mxu0
        %421 = vmatprep.mubr.f32.mxu0 0.0
        %422 = vmatmul.mubr.f32.gmra.mrb[0].mxu0 %v305
        %v423 = vpop.f32.mrb[0].mxu0
        %v424 = vadd.f32 0.0, %v423
        %v425 = vpop.f32.mrb[0].mxu0
        %426 = vmatprep.mubr.f32.mxu0 0.0
        %427 = vmatmul.mubr.f32.gmra.mrb[0].mxu0 %v306
        %v428 = vpop.f32.mrb[0].mxu0
        %v429 = vadd.f32 0.0, %v428
        %v430 = vpop.f32.mrb[0].mxu0
        %431 = vmatprep.mubr.f32.mxu0 0.0
        %432 = vmatmul.mubr.f32.gmra.mrb[0].mxu0 %v307
        %v433 = vpop.f32.mrb[0].mxu0
        %v434 = vadd.f32 0.0, %v433
        %v435 = vpop.f32.mrb[0].mxu0
        %436 = vmatprep.mubr.f32.mxu0 0.0
        %437 = vmatmul.mubr.f32.gmra.mrb[0].mxu0 %v308
        %v438 = vpop.f32.mrb[0].mxu0
        %v439 = vadd.f32 0.0, %v438
        %v440 = vpop.f32.mrb[0].mxu0
        %441 = vmatprep.mubr.f32.mxu0 0.0
        %442 = vmatmul.mubr.f32.gmra.mrb[0].mxu0 %v309
        %v443 = vpop.f32.mrb[0].mxu0
        %v444 = vadd.f32 0.0, %v443
        %v445 = vpop.f32.mrb[0].mxu0
        %446 = vmatprep.mubr.f32.mxu0 0.0
        %447 = vmatmul.mubr.f32.gmra.mrb[0].mxu0 %v310
        %v448 = vpop.f32.mrb[0].mxu0
        %v449 = vadd.f32 0.0, %v448
        %v450 = vpop.f32.mrb[0].mxu0
        %451 = vmatprep.mubr.f32.mxu0 0.0
        %452 = vmatmul.mubr.f32.gmra.mrb[0].mxu0 %v311
        %v453 = vpop.f32.mrb[0].mxu0
        %v454 = vadd.f32 0.0, %v453
        %v455 = vpop.f32.mrb[0].mxu0
        %456 = vmatprep.mubr.f32.mxu0 0.0
        %457 = vmatmul.mubr.f32.gmra.mrb[0].mxu0 %v312
        %v458 = vpop.f32.mrb[0].mxu0
        %v459 = vadd.f32 0.0, %v458
        %v460 = vpop.f32.mrb[0].mxu0
        %461 = vmatprep.mubr.f32.mxu0 0.0
        %462 = vmatmul.mubr.f32.gmra.mrb[0].mxu0 %v313
        %v463 = vpop.f32.mrb[0].mxu0
        %v464 = vadd.f32 0.0, %v463
        %v465 = vpop.f32.mrb[0].mxu0
        %466 = vmatprep.mubr.f32.mxu0 0.0
        %467 = vmatmul.mubr.f32.gmra.mrb[0].mxu0 %v314
        %v468 = vpop.f32.mrb[0].mxu0
        %v469 = vadd.f32 0.0, %v468
        %v470 = vpop.f32.mrb[0].mxu0
        %471 = vmatprep.mubr.f32.mxu0 0.0
        %472 = vmatmul.mubr.f32.gmra.mrb[0].mxu0 %v315
        %v473 = vpop.f32.mrb[0].mxu0
        %v474 = vadd.f32 0.0, %v473
        %v475 = vpop.f32.mrb[0].mxu0
        %476 = vdwg.mxu0
        %v477 = vadd.f32 %v284, %v399
        %v478 = vadd.f32 %v285, %v404
        %v479 = vadd.f32 %v286, %v409
        %v480 = vadd.f32 %v287, %v414
        %v481 = vadd.f32 %v288, %v419
        %v482 = vadd.f32 %v289, %v424
        %v483 = vadd.f32 %v290, %v429
        %v484 = vadd.f32 %v291, %v434
        %v485 = vadd.f32 %v292, %v439
        %v486 = vadd.f32 %v293, %v444
        %v487 = vadd.f32 %v294, %v449
        %v488 = vadd.f32 %v295, %v454
        %v489 = vadd.f32 %v296, %v459
        %v490 = vadd.f32 %v297, %v464
        %v491 = vadd.f32 %v298, %v469
        %v492 = vadd.f32 %v299, %v474
        %493 = vst [vmem:[#allocation2] sm:$0xff] %v477
        %494 = vst [vmem:[#allocation2 + $0x8] sm:$0xff] %v478
        %495 = vst [vmem:[#allocation2 + $0x10] sm:$0xff] %v479
        %496 = vst [vmem:[#allocation2 + $0x18] sm:$0xff] %v480
        %497 = vst [vmem:[#allocation2 + $0x20] sm:$0xff] %v481
        %498 = vst [vmem:[#allocation2 + $0x28] sm:$0xff] %v482
        %499 = vst [vmem:[#allocation2 + $0x30] sm:$0xff] %v483
        %500 = vst [vmem:[#allocation2 + $0x38] sm:$0xff] %v484
        %501 = vst [vmem:[#allocation2 + $0x40] sm:$0xff] %v485
        %502 = vst [vmem:[#allocation2 + $0x48] sm:$0xff] %v486
        %503 = vst [vmem:[#allocation2 + $0x50] sm:$0xff] %v487
        %504 = vst [vmem:[#allocation2 + $0x58] sm:$0xff] %v488
        %505 = vst [vmem:[#allocation2 + $0x60] sm:$0xff] %v489
        %506 = vst [vmem:[#allocation2 + $0x68] sm:$0xff] %v490
        %507 = vst [vmem:[#allocation2 + $0x70] sm:$0xff] %v491
        %508 = vst [vmem:[#allocation2 + $0x78] sm:$0xff] %v492
        // Predicated region
        $region45: #{unit_forward.1} parent=31 // pred_check
          %p509 = pneg %p257
        $region46: #{unit_forward.1} parent=31 // pred_check_branch
          %511 = sbr.rel (%p509) target = $region48
        $region47: #{unit_forward.1} parent=31 // pred_region
          %v512 = vld [vmem:[#allocation2] sm:$0xff]
          %v513 = vld [vmem:[#allocation2 + $0x8] sm:$0xff]
          %v514 = vld [vmem:[#allocation2 + $0x10] sm:$0xff]
          %v515 = vld [vmem:[#allocation2 + $0x18] sm:$0xff]
          %v516 = vld [vmem:[#allocation2 + $0x20] sm:$0xff]
          %v517 = vld [vmem:[#allocation2 + $0x28] sm:$0xff]
          %v518 = vld [vmem:[#allocation2 + $0x30] sm:$0xff]
          %v519 = vld [vmem:[#allocation2 + $0x38] sm:$0xff]
          %v520 = vld [vmem:[#allocation2 + $0x40] sm:$0xff]
          %v521 = vld [vmem:[#allocation2 + $0x48] sm:$0xff]
          %v522 = vld [vmem:[#allocation2 + $0x50] sm:$0xff]
          %v523 = vld [vmem:[#allocation2 + $0x58] sm:$0xff]
          %v524 = vld [vmem:[#allocation2 + $0x60] sm:$0xff]
          %v525 = vld [vmem:[#allocation2 + $0x68] sm:$0xff]
          %v526 = vld [vmem:[#allocation2 + $0x70] sm:$0xff]
          %v527 = vld [vmem:[#allocation2 + $0x78] sm:$0xff]
          %v528 = vtanh.pop %v512
          %v529 = vtanh.pop %v513
          %v530 = vtanh.pop %v514
          %v531 = vtanh.pop %v515
          %v532 = vtanh.pop %v516
          %v533 = vtanh.pop %v517
          %v534 = vtanh.pop %v518
          %v535 = vtanh.pop %v519
          %v536 = vtanh.pop %v520
          %v537 = vtanh.pop %v521
          %v538 = vtanh.pop %v522
          %v539 = vtanh.pop %v523
          %v540 = vtanh.pop %v524
          %v541 = vtanh.pop %v525
          %v542 = vtanh.pop %v526
          %v543 = vtanh.pop %v527
          %544 = vst [vmem:[%s250] sm:$0xff] %v528
          %545 = vst [vmem:[%s250 + $0x8] sm:$0xff] %v529
          %546 = vst [vmem:[%s250 + $0x10] sm:$0xff] %v530
          %547 = vst [vmem:[%s250 + $0x18] sm:$0xff] %v531
          %548 = vst [vmem:[%s250 + $0x20] sm:$0xff] %v532
          %549 = vst [vmem:[%s250 + $0x28] sm:$0xff] %v533
          %550 = vst [vmem:[%s250 + $0x30] sm:$0xff] %v534
          %551 = vst [vmem:[%s250 + $0x38] sm:$0xff] %v535
          %552 = vst [vmem:[%s250 + $0x40] sm:$0xff] %v536
          %553 = vst [vmem:[%s250 + $0x48] sm:$0xff] %v537
          %554 = vst [vmem:[%s250 + $0x50] sm:$0xff] %v538
          %555 = vst [vmem:[%s250 + $0x58] sm:$0xff] %v539
          %556 = vst [vmem:[%s250 + $0x60] sm:$0xff] %v540
          %557 = vst [vmem:[%s250 + $0x68] sm:$0xff] %v541
          %558 = vst [vmem:[%s250 + $0x70] sm:$0xff] %v542
          %559 = vst [vmem:[%s250 + $0x78] sm:$0xff] %v543
        $region48: #{unit_forward.1} parent=31 // pred_fallthru
          _
        %s560 = sand.u32 %s132, 1
        %s561 = scalar_lea.sflag [#allocation5], %s560
        %s562 = sand.u32 %s132, 1
        %s563 = smul.addr %s562, 128
        %s564 = scalar_lea.vmem [#allocation8], %s563
        // Predicated region
        $region49: #{unit_forward.1} parent=31 // pred_check
          %p565 = pneg %p142
        $region50: #{unit_forward.1} parent=31 // pred_check_branch
          %567 = sbr.rel (%p565) target = $region52
        $region51: #{unit_forward.1} parent=31 // pred_region
          %s568 = smul.u32 16, %s26
          %s570 = ssub.s32 2048, 2048
          %571 = vsyncadd %s561, %s570
          %s572 = smul.addr %s568, 2
          %s573 = sadd.s32 %s27, %s572
          %s574 = smul.addr %s573, 128
          %s575 = scalar_lea.hbm %s3, %s574
          %s576 = sshll.u32 %s564, 4
          %s577 = int_to_ptr.vmem [resolvable:$true] %s576
          %582 = dma.vmem_to_hbm [thread:$0]  %s577, 2048, %s575, %s561, 128, 256, 8
        $region52: #{unit_forward.1} parent=31 // pred_fallthru
          _
      $region32: #{unit_forward.1} parent=5 // pred_fallthru
        _
      %p583 = scmp.le.s32.totalorder 2, %s16
      // Predicated region
      $region53: #{unit_forward.1} parent=5 // pred_check
        %p584 = pneg %p583
      $region54: #{unit_forward.1} parent=5 // pred_check_branch
        %586 = sbr.rel (%p584) target = $region56
      $region55: #{unit_forward.1} parent=5 // pred_region
        %s587 = ssub.s32 %s16, 2
        // Predicated region
        $region57: #{unit_forward.1} parent=55 // pred_check
          %p588 = pneg %p148
        $region58: #{unit_forward.1} parent=55 // pred_check_branch
          %590 = sbr.rel (%p588) target = $region60
        $region59: #{unit_forward.1} parent=55 // pred_region
          %s591 = sand.u32 %s133, 1
          %s592 = scalar_lea.sflag [#allocation5], %s591
          %s593 = sand.u32 %s133, 1
          %s594 = smul.addr %s593, 128
          %s595 = scalar_lea.vmem [#allocation8], %s594
          %596 = dma.done %s592, 2048
        $region60: #{unit_forward.1} parent=55 // pred_fallthru
          _
      $region56: #{unit_forward.1} parent=5 // pred_fallthru
        _
    $region6: #{unit_forward.1} parent=1 // loop_footer
      %s20 = sadd.s32 1, %s16
    $region7: #{unit_forward.1} parent=1 // loop_footer_branch
      %15 = sbr.rel target = $region3
    $region8: #{unit_forward.1} parent=1 // loop_exit
      _
    %597 = vsyncpa [#allocation4], 1
    %s598 = scalar_lea.sflag [#allocation4], 1
    %599 = vsyncpa %s598, 1
    %600 = vsyncpa [#allocation7], 1
    %s601 = scalar_lea.sflag [#allocation7], 1
    %602 = vsyncpa %s601, 1
    %603 = vsyncpa [#allocation5], 1
    %s604 = scalar_lea.sflag [#allocation5], 1
    %605 = vsyncpa %s604, 1

</llo_original>
